<compile_context>
chip_gen: v7x
topology: tpu7x:2x2x1
jax: 0.10.0
libtpu: 0.0.40
codegen_flags: <defaults>
</compile_context>

<pallas_src>
import jax
import jax.numpy as jnp
from jax.experimental import pallas as pl
from jax.experimental.pallas import tpu as pltpu


def _round_up(n, m):
    return ((n + m - 1) // m) * m


def _softrmax_kernel(x_ref, o_ref):
    x = x_ref[...].astype(jnp.float32)                       # [TB, C]
    xx = x * x
    s = jnp.sum(xx, axis=-1, keepdims=True)                  # [TB, 1]  ||x||^2
    # ||x - e_i||^2 = (||x||^2 - x_i^2) + (x_i - 1)^2   (identity prototypes)
    d = (s - xx) + (x - 1.0) * (x - 1.0)                     # [TB, C]
    nu = 1.0 / d + 1e-20                                     # matches torch: 1/sum + eps
    denom = jnp.sum(nu, axis=-1, keepdims=True)              # [TB, 1]
    o_ref[...] = (nu * (1.0 / denom)).astype(o_ref.dtype)


def softrmax(x, num_classes, tile_b=None):
    B, C = x.shape
    assert C == num_classes

    # Batch tile: multiple of 8, big enough to amortize the ~0.35us/step grid
    # overhead, small enough that double-buffered in+out f32 blocks stay well
    # under the scoped-VMEM default on every chip (incl. v7x's 64 MiB).
    if tile_b is None:
        lanes = max(C, 128)  # VMEM lane footprint is padded to >=128 internally
        budget_rows = (8 * 1024 * 1024) // (4 * lanes * 4)   # ~8 MiB total
        tile_b = int(max(8, min(1024, budget_rows)))
    tile_b = max(8, (tile_b // 8) * 8)

    if B <= tile_b:
        # Single block covering the whole batch (full-dim block: no padding,
        # works for any B including B not divisible by 8).
        tile_b = B
        b_pad = B
    else:
        b_pad = _round_up(B, tile_b)

    x_p = x if b_pad == B else jnp.pad(x, ((0, b_pad - B), (0, 0)))
    grid_b = b_pad // tile_b

    out_p = pl.pallas_call(
        _softrmax_kernel,
        out_shape=jax.ShapeDtypeStruct((b_pad, C), x.dtype),
        grid_spec=pltpu.PrefetchScalarGridSpec(
            num_scalar_prefetch=0,
            grid=(grid_b,),
            in_specs=[pl.BlockSpec((tile_b, C), lambda i: (i, 0))],
            out_specs=pl.BlockSpec((tile_b, C), lambda i: (i, 0)),
        ),
        compiler_params=pltpu.CompilerParams(
            dimension_semantics=("parallel",),
            vmem_limit_bytes=32 * 1024 * 1024,
        ),
    )(x_p)

    return out_p[:B] if b_pad != B else out_p


def softrmax_ref(x, num_classes):
    # Pure-JAX reference mirroring the PyTorch loops exactly.
    e = jnp.eye(num_classes, dtype=x.dtype)
    nu = [1.0 / jnp.sum((x - e[i]) ** 2, axis=1) + 1e-20 for i in range(num_classes)]
    tot = sum(nu)
    pos = [nu[i] / tot for i in range(num_classes)]
    return jnp.stack(pos, axis=1)


if __name__ == "__main__":
    B, C = 8, 4
    key = jax.random.PRNGKey(0)
    x = jax.random.normal(key, (B, C), dtype=jnp.float32)

    out = softrmax(x, num_classes=C)
    out = jax.block_until_ready(out)

    ref = softrmax_ref(x, C)
    assert out.shape == (B, C)
    assert jnp.allclose(out, ref, atol=1e-5, rtol=1e-5)

    print("KERNEL_OK")
</pallas_src>

<mosaic_0001>
module attributes {stable_mosaic.version = 11 : i64} {
  func.func @_softrmax_kernel(%arg0: i32, %arg1: memref<8x4xf32, #tpu.memory_space<vmem>>, %arg2: memref<8x4xf32, #tpu.memory_space<vmem>>) attributes {dimension_semantics = [#tpu.dimension_semantics<parallel>], iteration_bounds = array<i64: 1>, scalar_prefetch = 0 : i64, scratch_operands = 0 : i64, tpu.core_type = #tpu.core_type<tc>, window_params = [{transform_indices = @transform_0, window_bounds = array<i64: 8, 4>}, {transform_indices = @transform_1, window_bounds = array<i64: 8, 4>}]} {
    %c0 = arith.constant 0 : index
    %c0_0 = arith.constant 0 : index
    %0 = vector.load %arg1[%c0, %c0_0] : memref<8x4xf32, #tpu.memory_space<vmem>>, vector<8x4xf32>
    %1 = arith.mulf %0, %0 : vector<8x4xf32>
    %cst = arith.constant dense<0.000000e+00> : vector<8xf32>
    %2 = vector.multi_reduction <add>, %1, %cst [1] : vector<8x4xf32> to vector<8xf32>
    %3 = vector.shape_cast %2 : vector<8xf32> to vector<8x1xf32>
    %4 = vector.broadcast %3 : vector<8x1xf32> to vector<8x4xf32>
    %5 = arith.subf %4, %1 : vector<8x4xf32>
    %cst_1 = arith.constant 1.000000e+00 : f32
    %6 = vector.broadcast %cst_1 : f32 to vector<8x4xf32>
    %7 = arith.subf %0, %6 : vector<8x4xf32>
    %cst_2 = arith.constant 1.000000e+00 : f32
    %8 = vector.broadcast %cst_2 : f32 to vector<8x4xf32>
    %9 = arith.subf %0, %8 : vector<8x4xf32>
    %10 = arith.mulf %7, %9 : vector<8x4xf32>
    %11 = arith.addf %5, %10 : vector<8x4xf32>
    %cst_3 = arith.constant 1.000000e+00 : f32
    %12 = vector.broadcast %cst_3 : f32 to vector<8x4xf32>
    %13 = arith.divf %12, %11 : vector<8x4xf32>
    %cst_4 = arith.constant 9.99999968E-21 : f32
    %14 = vector.broadcast %cst_4 : f32 to vector<8x4xf32>
    %15 = arith.addf %13, %14 : vector<8x4xf32>
    %cst_5 = arith.constant dense<0.000000e+00> : vector<8xf32>
    %16 = vector.multi_reduction <add>, %15, %cst_5 [1] : vector<8x4xf32> to vector<8xf32>
    %17 = vector.shape_cast %16 : vector<8xf32> to vector<8x1xf32>
    %cst_6 = arith.constant 1.000000e+00 : f32
    %18 = vector.broadcast %cst_6 : f32 to vector<8x1xf32>
    %19 = arith.divf %18, %17 : vector<8x1xf32>
    %20 = vector.broadcast %19 : vector<8x1xf32> to vector<8x4xf32>
    %21 = arith.mulf %15, %20 : vector<8x4xf32>
    %c0_7 = arith.constant 0 : index
    %c0_8 = arith.constant 0 : index
    %22 = vector.load %arg2[%c0_7, %c0_8] : memref<8x4xf32, #tpu.memory_space<vmem>>, vector<8x4xf32>
    tpu.vector_store %arg2[%c0_7, %c0_8], %21 {strides = array<i32>} : memref<8x4xf32, #tpu.memory_space<vmem>>, vector<8x4xf32>,
    return
  }
  func.func @transform_0(%arg0: i32) -> (i32, i32) {
    %c0_i32 = arith.constant 0 : i32
    %c0_i32_0 = arith.constant 0 : i32
    return %arg0, %c0_i32 : i32, i32
  }
  func.func @transform_1(%arg0: i32) -> (i32, i32) {
    %c0_i32 = arith.constant 0 : i32
    %c0_i32_0 = arith.constant 0 : i32
    return %arg0, %c0_i32 : i32, i32
  }
}

</mosaic_0001>

<llo_original>
// kernel: tpu_custom_call.1
$region0: #{tpu_custom_call.1}
  #allocation0 [shape = 'u32[]', space=smem, size = 0x4, offset = 0x4, fixed_abs, tag = 'smem constant byte address 0x4 - core index']
  #allocation1 [shape = 'u32[144,128]{1,0:T(1,128)}', space=vmem, size = 0x12000, scoped, tag = 'internal scratch']
  %s0 = inlined_call_operand.vmem [shape: f32[8,4], index: 0, kind: input, shape index: {}]
  %s1 = inlined_call_operand.vmem [shape: f32[8,4], index: 1, kind: output, shape index: {}]
  %s2 = sld [smem:[#allocation0]]
  $region14: #{tpu_custom_call.1} parent=0
    _
  %s4 = ssub.s32 1, %s2
  %s5 = scalar_select 0, %s4, %s2
  // Predicated region
  $region2: #{tpu_custom_call.1} parent=0 // pred_check
    _
  $region3: #{tpu_custom_call.1} parent=0 // pred_check_branch
    %7 = sbr.rel (0) target = $region5
  $region4: #{tpu_custom_call.1} parent=0 // pred_region
    _
  $region5: #{tpu_custom_call.1} parent=0 // pred_fallthru
    _
  %v8 = vld [vmem:[%s0] sm:$0xff]
  %v9 = vmul.f32 %v8, %v8
  %vm10 = vcmask 31744
  %v11 = vsel %vm10, %v9, 0.0
  %12 = vadd.xlane.f32.xlu0 %v11
  %v13 = vpop.xlane.xlu0 %12
  %v14 = vsub.f32 %v13, %v9
  %v15 = vsub.f32 %v8, 1.0
  %v16 = vmul.f32 %v15, %v15
  %v17 = vadd.f32 %v14, %v16
  %v18 = vrcp.pop %v17
  %v19 = vmul.f32 1.0, %v18
  %v20 = vadd.f32 %v19, 1e-20
  %v21 = vsel %vm10, %v20, 0.0
  %22 = vadd.xlane.f32.xlu0 %v21
  %v23 = vpop.xlane.xlu0 %22
  %v24 = vrcp.pop %v23
  %v25 = vmul.f32 1.0, %v24
  %v26 = vmul.f32 %v20, %v25
  %27 = vst.msk [vmem:[%s1] sm:$0xff] %vm10, %v26
  // Predicated region
  $region6: #{tpu_custom_call.1} parent=0 // pred_check
    _
  $region7: #{tpu_custom_call.1} parent=0 // pred_check_branch
    %29 = sbr.rel (0) target = $region9
  $region8: #{tpu_custom_call.1} parent=0 // pred_region
    _
  $region9: #{tpu_custom_call.1} parent=0 // pred_fallthru
    _
  // Predicated region
  $region10: #{tpu_custom_call.1} parent=0 // pred_check
    _
  $region11: #{tpu_custom_call.1} parent=0 // pred_check_branch
    %31 = sbr.rel (0) target = $region13
  $region12: #{tpu_custom_call.1} parent=0 // pred_region
    _
  $region13: #{tpu_custom_call.1} parent=0 // pred_fallthru
    _

</llo_original>
